<compile_context>
chip_gen: v6e
topology: v6e:2x2x1
jax: 0.10.0
libtpu: 0.0.40
codegen_flags: <defaults>
</compile_context>

<pallas_src>
import jax
import jax.numpy as jnp
from jax.experimental import pallas as pl
from jax.experimental.pallas import tpu as pltpu

LANE = 128
SUBLANE = 8


def _round_up(x, m):
    return ((x + m - 1) // m) * m


def mlp_kernel(x_ref,
               w1_ref, b1_ref, w2_ref, b2_ref,
               w3_ref, b3_ref, w4_ref, b4_ref,
               o_ref):
    # fc1 + relu.  Activations cast to the weight dtype (bf16 path) right
    # before each dot; accumulation and the bias/ReLU epilogue stay fp32.
    h = jnp.dot(x_ref[...].astype(w1_ref.dtype), w1_ref[...],
                preferred_element_type=jnp.float32)
    h = jnp.maximum(h + b1_ref[...], 0.0)
    # fc2 + relu
    h = jnp.dot(h.astype(w2_ref.dtype), w2_ref[...],
                preferred_element_type=jnp.float32)
    h = jnp.maximum(h + b2_ref[...], 0.0)
    # fc3 + relu
    h = jnp.dot(h.astype(w3_ref.dtype), w3_ref[...],
                preferred_element_type=jnp.float32)
    h = jnp.maximum(h + b3_ref[...], 0.0)
    # fc4 (no activation), narrow (num_classes-wide) output block
    h = jnp.dot(h.astype(w4_ref.dtype), w4_ref[...],
                preferred_element_type=jnp.float32)
    o_ref[...] = (h + b4_ref[...]).astype(o_ref.dtype)


def prepare_params(params, weights_dtype=jnp.bfloat16):
    """Call ONCE, offline (not per forward).  Pads hidden dims to 128-lane
    multiples; the fc1 input dim and the fc4 output dim stay unpadded.
    Weights are (in_features, out_features); biases are (1, out) and stay fp32
    so the bias/ReLU epilogue is fp32 on every TPU generation."""
    in_features = params["w1"].shape[0]
    num_classes = params["w4"].shape[1]
    widths = [in_features,
              _round_up(params["w1"].shape[1], LANE),   # 192 -> 256
              _round_up(params["w2"].shape[1], LANE),   # 96  -> 128
              _round_up(params["w3"].shape[1], LANE),   # 48  -> 128
              num_classes]                              # unpadded
    padded = {}
    for li in range(1, 5):
        w = params[f"w{li}"]
        b = params[f"b{li}"]
        in_p, out_p = widths[li - 1], widths[li]
        w_pad = jnp.zeros((in_p, out_p), weights_dtype)
        w_pad = w_pad.at[:w.shape[0], :w.shape[1]].set(w.astype(weights_dtype))
        b_pad = jnp.zeros((1, out_p), jnp.float32)
        b_pad = b_pad.at[:, :b.shape[1]].set(b.astype(jnp.float32))
        padded[f"w{li}"] = w_pad
        padded[f"b{li}"] = b_pad
    return padded


def net_forward(x, padded_params, *, block_m=1024, vmem_limit_bytes=None):
    """x: (B, input_size).  padded_params: output of prepare_params().
    Returns (B, num_classes) fp32 logits."""
    p = padded_params
    B, in_features = x.shape
    assert p["w1"].shape[0] == in_features, "x width must match fc1 in_features"
    num_classes = p["w4"].shape[1]
    h1, h2, h3 = p["w1"].shape[1], p["w2"].shape[1], p["w3"].shape[1]

    # Batch tiling.  No padding or extra copies: Pallas clips the last
    # (partial) block's DMAs to the array bounds; rows past B compute garbage
    # that is never written back -- safe because an MLP has no cross-row mixing.
    bm = min(block_m, _round_up(B, SUBLANE))
    grid = (pl.cdiv(B, bm),)
    # TODO(synk): on v7x (2 TensorCores) choose bm <= round_up(B/2, 8) for
    # medium batches so both cores get a grid step, and re-check VMEM vs its
    # 64 MiB (vmem_limit_bytes) if block_m is raised further.

    def const_spec(arr):
        return pl.BlockSpec(arr.shape, lambda i: (0, 0))

    in_specs = [pl.BlockSpec((bm, in_features), lambda i: (i, 0))]
    weight_args = []
    for li in range(1, 5):
        for name in (f"w{li}", f"b{li}"):
            arr = p[name]
            in_specs.append(const_spec(arr))
            weight_args.append(arr)

    flops = 2 * B * (in_features * h1 + h1 * h2 + h2 * h3 + h3 * num_classes)
    bytes_accessed = (
        x.size * x.dtype.itemsize
        + sum(a.size * a.dtype.itemsize for a in weight_args)
        + B * num_classes * 4)
    cost = pl.CostEstimate(flops=flops, transcendentals=0,
                           bytes_accessed=bytes_accessed)

    return pl.pallas_call(
        mlp_kernel,
        out_shape=jax.ShapeDtypeStruct((B, num_classes), jnp.float32),
        grid_spec=pltpu.PrefetchScalarGridSpec(
            num_scalar_prefetch=0,
            grid=grid,
            in_specs=in_specs,
            out_specs=pl.BlockSpec((bm, num_classes), lambda i: (i, 0)),
        ),
        compiler_params=pltpu.CompilerParams(
            dimension_semantics=("parallel",),
            vmem_limit_bytes=vmem_limit_bytes),
        cost_estimate=cost,
    )(x, *weight_args)


def init_params(key, input_size, num_classes):
    """Deterministic init mimicking nn.Linear default (uniform +/- 1/sqrt(fan_in)).
    Weights stored as (in_features, out_features), i.e. transposed vs. PyTorch."""
    dims = [input_size, 192, 96, 48, num_classes]
    params = {}
    keys = jax.random.split(key, 2 * (len(dims) - 1))
    for li in range(len(dims) - 1):
        fan_in, fan_out = dims[li], dims[li + 1]
        bound = 1.0 / jnp.sqrt(jnp.float32(fan_in))
        w = jax.random.uniform(keys[2 * li], (fan_in, fan_out),
                               jnp.float32, -bound, bound)
        b = jax.random.uniform(keys[2 * li + 1], (1, fan_out),
                               jnp.float32, -bound, bound)
        params[f"w{li + 1}"] = w
        params[f"b{li + 1}"] = b
    return params


def reference_forward(x, params):
    h = jnp.maximum(x @ params["w1"] + params["b1"], 0.0)
    h = jnp.maximum(h @ params["w2"] + params["b2"], 0.0)
    h = jnp.maximum(h @ params["w3"] + params["b3"], 0.0)
    return h @ params["w4"] + params["b4"]


if __name__ == "__main__":
    key = jax.random.PRNGKey(0)
    k_x, k_p = jax.random.split(key)

    batch, input_size, num_classes = 8, 32, 10
    x = jax.random.normal(k_x, (batch, input_size), jnp.float32)
    params = init_params(k_p, input_size, num_classes)
    ref = reference_forward(x, params)

    # fp32 weights: validates the padding/tiling scheme with a tight tolerance.
    p_f32 = prepare_params(params, weights_dtype=jnp.float32)
    out_f32 = jax.block_until_ready(net_forward(x, p_f32))
    assert out_f32.shape == (batch, num_classes)
    assert jnp.allclose(out_f32, ref, atol=1e-4, rtol=1e-4), "fp32 mismatch vs reference"

    # bf16 weights / bf16 matmul inputs (production default on v5e/v6e/v7x):
    # fp32 accumulation + fp32 epilogue; tolerance loosened for bf16 rounding.
    p_bf16 = prepare_params(params)  # bfloat16 default
    out_bf16 = jax.block_until_ready(net_forward(x, p_bf16))
    assert out_bf16.shape == (batch, num_classes)
    assert jnp.allclose(out_bf16, ref, atol=5e-2, rtol=5e-2), "bf16 mismatch vs reference"

    print("KERNEL_OK")
</pallas_src>

<mosaic_0001>
module attributes {stable_mosaic.version = 11 : i64} {
  func.func @mlp_kernel(%arg0: i32, %arg1: memref<8x32xf32, #tpu.memory_space<vmem>>, %arg2: memref<32x256xf32, #tpu.memory_space<vmem>>, %arg3: memref<1x256xf32, #tpu.memory_space<vmem>>, %arg4: memref<256x128xf32, #tpu.memory_space<vmem>>, %arg5: memref<1x128xf32, #tpu.memory_space<vmem>>, %arg6: memref<128x128xf32, #tpu.memory_space<vmem>>, %arg7: memref<1x128xf32, #tpu.memory_space<vmem>>, %arg8: memref<128x10xf32, #tpu.memory_space<vmem>>, %arg9: memref<1x10xf32, #tpu.memory_space<vmem>>, %arg10: memref<8x10xf32, #tpu.memory_space<vmem>>) attributes {dimension_semantics = [#tpu.dimension_semantics<parallel>], iteration_bounds = array<i64: 1>, scalar_prefetch = 0 : i64, scratch_operands = 0 : i64, tpu.core_type = #tpu.core_type<tc>, window_params = [{transform_indices = @transform_0, window_bounds = array<i64: 8, 32>}, {pipeline_mode = #tpu.pipeline_mode<synchronous>, transform_indices = @transform_1, window_bounds = array<i64: 32, 256>}, {pipeline_mode = #tpu.pipeline_mode<synchronous>, transform_indices = @transform_2, window_bounds = array<i64: 1, 256>}, {pipeline_mode = #tpu.pipeline_mode<synchronous>, transform_indices = @transform_3, window_bounds = array<i64: 256, 128>}, {pipeline_mode = #tpu.pipeline_mode<synchronous>, transform_indices = @transform_4, window_bounds = array<i64: 1, 128>}, {pipeline_mode = #tpu.pipeline_mode<synchronous>, transform_indices = @transform_5, window_bounds = array<i64: 128, 128>}, {pipeline_mode = #tpu.pipeline_mode<synchronous>, transform_indices = @transform_6, window_bounds = array<i64: 1, 128>}, {pipeline_mode = #tpu.pipeline_mode<synchronous>, transform_indices = @transform_7, window_bounds = array<i64: 128, 10>}, {pipeline_mode = #tpu.pipeline_mode<synchronous>, transform_indices = @transform_8, window_bounds = array<i64: 1, 10>}, {transform_indices = @transform_9, window_bounds = array<i64: 8, 10>}]} {
    %c0 = arith.constant 0 : index
    %c0_0 = arith.constant 0 : index
    %0 = vector.load %arg1[%c0, %c0_0] : memref<8x32xf32, #tpu.memory_space<vmem>>, vector<8x32xf32>
    %c0_1 = arith.constant 0 : index
    %c0_2 = arith.constant 0 : index
    %1 = vector.load %arg2[%c0_1, %c0_2] : memref<32x256xf32, #tpu.memory_space<vmem>>, vector<32x256xf32>
    %cst = arith.constant dense<0.000000e+00> : vector<8x256xf32>
    %2 = tpu.matmul %0, %1, %cst {dimension_numbers = #tpu.dot_dimension_numbers<[1], [0], [0], [1], [0, 0, 1, 1], [], []>} : vector<8x32xf32>, vector<32x256xf32>, vector<8x256xf32> -> vector<8x256xf32>
    %c0_3 = arith.constant 0 : index
    %c0_4 = arith.constant 0 : index
    %3 = vector.load %arg3[%c0_3, %c0_4] : memref<1x256xf32, #tpu.memory_space<vmem>>, vector<1x256xf32>
    %4 = vector.broadcast %3 : vector<1x256xf32> to vector<8x256xf32>
    %5 = arith.addf %2, %4 : vector<8x256xf32>
    %cst_5 = arith.constant 0.000000e+00 : f32
    %6 = vector.broadcast %cst_5 : f32 to vector<8x256xf32>
    %7 = arith.maximumf %5, %6 : vector<8x256xf32>
    %c0_6 = arith.constant 0 : index
    %c0_7 = arith.constant 0 : index
    %8 = vector.load %arg4[%c0_6, %c0_7] : memref<256x128xf32, #tpu.memory_space<vmem>>, vector<256x128xf32>
    %cst_8 = arith.constant dense<0.000000e+00> : vector<8x128xf32>
    %9 = tpu.matmul %7, %8, %cst_8 {dimension_numbers = #tpu.dot_dimension_numbers<[1], [0], [0], [1], [0, 0, 1, 1], [], []>} : vector<8x256xf32>, vector<256x128xf32>, vector<8x128xf32> -> vector<8x128xf32>
    %c0_9 = arith.constant 0 : index
    %c0_10 = arith.constant 0 : index
    %10 = vector.load %arg5[%c0_9, %c0_10] : memref<1x128xf32, #tpu.memory_space<vmem>>, vector<1x128xf32>
    %11 = vector.broadcast %10 : vector<1x128xf32> to vector<8x128xf32>
    %12 = arith.addf %9, %11 : vector<8x128xf32>
    %cst_11 = arith.constant 0.000000e+00 : f32
    %13 = vector.broadcast %cst_11 : f32 to vector<8x128xf32>
    %14 = arith.maximumf %12, %13 : vector<8x128xf32>
    %c0_12 = arith.constant 0 : index
    %c0_13 = arith.constant 0 : index
    %15 = vector.load %arg6[%c0_12, %c0_13] : memref<128x128xf32, #tpu.memory_space<vmem>>, vector<128x128xf32>
    %cst_14 = arith.constant dense<0.000000e+00> : vector<8x128xf32>
    %16 = tpu.matmul %14, %15, %cst_14 {dimension_numbers = #tpu.dot_dimension_numbers<[1], [0], [0], [1], [0, 0, 1, 1], [], []>} : vector<8x128xf32>, vector<128x128xf32>, vector<8x128xf32> -> vector<8x128xf32>
    %c0_15 = arith.constant 0 : index
    %c0_16 = arith.constant 0 : index
    %17 = vector.load %arg7[%c0_15, %c0_16] : memref<1x128xf32, #tpu.memory_space<vmem>>, vector<1x128xf32>
    %18 = vector.broadcast %17 : vector<1x128xf32> to vector<8x128xf32>
    %19 = arith.addf %16, %18 : vector<8x128xf32>
    %cst_17 = arith.constant 0.000000e+00 : f32
    %20 = vector.broadcast %cst_17 : f32 to vector<8x128xf32>
    %21 = arith.maximumf %19, %20 : vector<8x128xf32>
    %c0_18 = arith.constant 0 : index
    %c0_19 = arith.constant 0 : index
    %22 = vector.load %arg8[%c0_18, %c0_19] : memref<128x10xf32, #tpu.memory_space<vmem>>, vector<128x10xf32>
    %cst_20 = arith.constant dense<0.000000e+00> : vector<8x10xf32>
    %23 = tpu.matmul %21, %22, %cst_20 {dimension_numbers = #tpu.dot_dimension_numbers<[1], [0], [0], [1], [0, 0, 1, 1], [], []>} : vector<8x128xf32>, vector<128x10xf32>, vector<8x10xf32> -> vector<8x10xf32>
    %c0_21 = arith.constant 0 : index
    %c0_22 = arith.constant 0 : index
    %24 = vector.load %arg9[%c0_21, %c0_22] : memref<1x10xf32, #tpu.memory_space<vmem>>, vector<1x10xf32>
    %25 = vector.broadcast %24 : vector<1x10xf32> to vector<8x10xf32>
    %26 = arith.addf %23, %25 : vector<8x10xf32>
    %c0_23 = arith.constant 0 : index
    %c0_24 = arith.constant 0 : index
    %27 = vector.load %arg10[%c0_23, %c0_24] : memref<8x10xf32, #tpu.memory_space<vmem>>, vector<8x10xf32>
    tpu.vector_store %arg10[%c0_23, %c0_24], %26 {strides = array<i32>} : memref<8x10xf32, #tpu.memory_space<vmem>>, vector<8x10xf32>,
    return
  }
  func.func @transform_0(%arg0: i32) -> (i32, i32) {
    %c0_i32 = arith.constant 0 : i32
    %c0_i32_0 = arith.constant 0 : i32
    return %arg0, %c0_i32 : i32, i32
  }
  func.func @transform_1(%arg0: i32) -> (i32, i32) {
    %c0_i32 = arith.constant 0 : i32
    %c0_i32_0 = arith.constant 0 : i32
    %c0_i32_1 = arith.constant 0 : i32
    return %c0_i32, %c0_i32_0 : i32, i32
  }
  func.func @transform_2(%arg0: i32) -> (i32, i32) {
    %c0_i32 = arith.constant 0 : i32
    %c0_i32_0 = arith.constant 0 : i32
    %c0_i32_1 = arith.constant 0 : i32
    return %c0_i32, %c0_i32_0 : i32, i32
  }
  func.func @transform_3(%arg0: i32) -> (i32, i32) {
    %c0_i32 = arith.constant 0 : i32
    %c0_i32_0 = arith.constant 0 : i32
    %c0_i32_1 = arith.constant 0 : i32
    return %c0_i32, %c0_i32_0 : i32, i32
  }
  func.func @transform_4(%arg0: i32) -> (i32, i32) {
    %c0_i32 = arith.constant 0 : i32
    %c0_i32_0 = arith.constant 0 : i32
    %c0_i32_1 = arith.constant 0 : i32
    return %c0_i32, %c0_i32_0 : i32, i32
  }
  func.func @transform_5(%arg0: i32) -> (i32, i32) {
    %c0_i32 = arith.constant 0 : i32
    %c0_i32_0 = arith.constant 0 : i32
    %c0_i32_1 = arith.constant 0 : i32
    return %c0_i32, %c0_i32_0 : i32, i32
  }
  func.func @transform_6(%arg0: i32) -> (i32, i32) {
    %c0_i32 = arith.constant 0 : i32
    %c0_i32_0 = arith.constant 0 : i32
    %c0_i32_1 = arith.constant 0 : i32
    return %c0_i32, %c0_i32_0 : i32, i32
  }
  func.func @transform_7(%arg0: i32) -> (i32, i32) {
    %c0_i32 = arith.constant 0 : i32
    %c0_i32_0 = arith.constant 0 : i32
    %c0_i32_1 = arith.constant 0 : i32
    return %c0_i32, %c0_i32_0 : i32, i32
  }
  func.func @transform_8(%arg0: i32) -> (i32, i32) {
    %c0_i32 = arith.constant 0 : i32
    %c0_i32_0 = arith.constant 0 : i32
    %c0_i32_1 = arith.constant 0 : i32
    return %c0_i32, %c0_i32_0 : i32, i32
  }
  func.func @transform_9(%arg0: i32) -> (i32, i32) {
    %c0_i32 = arith.constant 0 : i32
    %c0_i32_0 = arith.constant 0 : i32
    return %arg0, %c0_i32 : i32, i32
  }
}

</mosaic_0001>

<llo_original>
// kernel: tpu_custom_call.1
$region0: #{tpu_custom_call.1}
  #allocation0 [shape = 'u32[]', space=smem, size = 0x4, offset = 0x4, fixed_abs, tag = 'smem constant byte address 0x4 - core index']
  #allocation1 [shape = 'u32[144,128]{1,0:T(1,128)}', space=vmem, size = 0x12000, scoped, tag = 'internal scratch']
  %s0 = inlined_call_operand.vmem [shape: f32[8,32], index: 0, kind: input, shape index: {}]
  %s1 = inlined_call_operand.hbm [shape: f32[32,256], index: 1, kind: input, shape index: {}]
  %s2 = inlined_call_operand.vmem [shape: f32[1,256], index: 2, kind: input, shape index: {}]
  %s3 = inlined_call_operand.hbm [shape: f32[256,128], index: 3, kind: input, shape index: {}]
  %s4 = inlined_call_operand.vmem [shape: f32[1,128], index: 4, kind: input, shape index: {}]
  %s5 = inlined_call_operand.vmem [shape: f32[128,128], index: 5, kind: input, shape index: {}]
  %s6 = inlined_call_operand.vmem [shape: f32[1,128], index: 6, kind: input, shape index: {}]
  %s7 = inlined_call_operand.vmem [shape: f32[128,10], index: 7, kind: input, shape index: {}]
  %s8 = inlined_call_operand.vmem [shape: f32[1,10], index: 8, kind: input, shape index: {}]
  %s9 = inlined_call_operand.hbm [shape: f32[8,10], index: 9, kind: output, shape index: {}]
  %s10 = sld [smem:[#allocation0]]
  $region54: #{tpu_custom_call.1} parent=0
    _
  %s12 = ssub.s32 1, %s10
  %s13 = scalar_select 0, %s12, %s10
  $region1: #{tpu_custom_call.1} parent=0
    #allocation2 [shape = 'u8[32768]{0}', space=vmem, size = 0x8000, scoped, tag = 'input window, operand 1, single buffered']
    #allocation3 [shape = 's32[1]{0}', space=sflag, size = 0x4, scoped, tag = 'scoped memory for tpu_custom_call.1']
    #allocation4 [shape = 's32[1]{0}', space=sflag, size = 0x4, scoped, tag = 'scoped memory for tpu_custom_call.1']
    #allocation5 [shape = 'u8[131072]{0}', space=vmem, size = 0x20000, scoped, tag = 'input window, operand 3, single buffered']
    #allocation6 [shape = 's32[1]{0}', space=sflag, size = 0x4, scoped, tag = 'scoped memory for tpu_custom_call.1']
    #allocation7 [shape = 'u8[4096]{0}', space=vmem, size = 0x1000, scoped, tag = 'output window, operand 0, single buffered']
    %14 = vsyncpa [#allocation3], 0
    %15 = vsyncpa [#allocation6], 0
    %16 = vsyncpa [#allocation4], 0
    // Predicated region
    $region2: #{tpu_custom_call.1} parent=1 // pred_check
      _
    $region3: #{tpu_custom_call.1} parent=1 // pred_check_branch
      %18 = sbr.rel (0) target = $region5
    $region4: #{tpu_custom_call.1} parent=1 // pred_region
      _
    $region5: #{tpu_custom_call.1} parent=1 // pred_fallthru
      _
    // Predicated region
    $region6: #{tpu_custom_call.1} parent=1 // pred_check
      _
    $region7: #{tpu_custom_call.1} parent=1 // pred_check_branch
      %20 = sbr.rel (0) target = $region9
    $region8: #{tpu_custom_call.1} parent=1 // pred_region
      %s22 = ssub.s32 1024, 1024
      %23 = vsyncadd [#allocation3], %s22
      %s24 = sshll.u32 [#allocation2], 4
      %s25 = int_to_ptr.vmem [resolvable:$true] %s24
      %30 = dma.hbm_to_vmem [thread:$0]  %s1, 1024, %s25, [#allocation3], 256, 256, 16
    $region9: #{tpu_custom_call.1} parent=1 // pred_fallthru
      _
    // Predicated region
    $region10: #{tpu_custom_call.1} parent=1 // pred_check
      _
    $region11: #{tpu_custom_call.1} parent=1 // pred_check_branch
      %32 = sbr.rel (0) target = $region13
    $region12: #{tpu_custom_call.1} parent=1 // pred_region
      _
    $region13: #{tpu_custom_call.1} parent=1 // pred_fallthru
      _
    // Predicated region
    $region14: #{tpu_custom_call.1} parent=1 // pred_check
      _
    $region15: #{tpu_custom_call.1} parent=1 // pred_check_branch
      %34 = sbr.rel (0) target = $region17
    $region16: #{tpu_custom_call.1} parent=1 // pred_region
      %s36 = ssub.s32 4096, 4096
      %37 = vsyncadd [#allocation6], %s36
      %s38 = sshll.u32 [#allocation5], 4
      %s39 = int_to_ptr.vmem [resolvable:$true] %s38
      %44 = dma.hbm_to_vmem [thread:$0]  %s3, 4096, %s39, [#allocation6], 128, 128, 8
    $region17: #{tpu_custom_call.1} parent=1 // pred_fallthru
      _
    // Predicated region
    $region18: #{tpu_custom_call.1} parent=1 // pred_check
      _
    $region19: #{tpu_custom_call.1} parent=1 // pred_check_branch
      %46 = sbr.rel (0) target = $region21
    $region20: #{tpu_custom_call.1} parent=1 // pred_region
      _
    $region21: #{tpu_custom_call.1} parent=1 // pred_fallthru
      _
    // Predicated region
    $region22: #{tpu_custom_call.1} parent=1 // pred_check
      _
    $region23: #{tpu_custom_call.1} parent=1 // pred_check_branch
      %48 = sbr.rel (0) target = $region25
    $region24: #{tpu_custom_call.1} parent=1 // pred_region
      _
    $region25: #{tpu_custom_call.1} parent=1 // pred_fallthru
      _
    // Predicated region
    $region26: #{tpu_custom_call.1} parent=1 // pred_check
      _
    $region27: #{tpu_custom_call.1} parent=1 // pred_check_branch
      %50 = sbr.rel (0) target = $region29
    $region28: #{tpu_custom_call.1} parent=1 // pred_region
      _
    $region29: #{tpu_custom_call.1} parent=1 // pred_fallthru
      _
    // Predicated region
    $region30: #{tpu_custom_call.1} parent=1 // pred_check
      _
    $region31: #{tpu_custom_call.1} parent=1 // pred_check_branch
      %52 = sbr.rel (0) target = $region33
    $region32: #{tpu_custom_call.1} parent=1 // pred_region
      _
    $region33: #{tpu_custom_call.1} parent=1 // pred_fallthru
      _
    // Predicated region
    $region34: #{tpu_custom_call.1} parent=1 // pred_check
      _
    $region35: #{tpu_custom_call.1} parent=1 // pred_check_branch
      %54 = sbr.rel (0) target = $region37
    $region36: #{tpu_custom_call.1} parent=1 // pred_region
      _
    $region37: #{tpu_custom_call.1} parent=1 // pred_fallthru
      _
    // Predicated region
    $region38: #{tpu_custom_call.1} parent=1 // pred_check
      _
    $region39: #{tpu_custom_call.1} parent=1 // pred_check_branch
      %56 = sbr.rel (0) target = $region41
    $region40: #{tpu_custom_call.1} parent=1 // pred_region
      %57 = dma.done [#allocation3], 1024
    $region41: #{tpu_custom_call.1} parent=1 // pred_fallthru
      _
    // Predicated region
    $region42: #{tpu_custom_call.1} parent=1 // pred_check
      _
    $region43: #{tpu_custom_call.1} parent=1 // pred_check_branch
      %59 = sbr.rel (0) target = $region45
    $region44: #{tpu_custom_call.1} parent=1 // pred_region
      %60 = dma.done [#allocation6], 4096
    $region45: #{tpu_custom_call.1} parent=1 // pred_fallthru
      _
    %v61 = vld [vmem:[%s0] sm:$0xff]
    %v62 = vld [vmem:[#allocation2] sm:$0xff]
    %v63 = vld [vmem:[#allocation2 + $0x8] sm:$0xff]
    %v64 = vld [vmem:[#allocation2 + $0x10] sm:$0xff]
    %v65 = vld [vmem:[#allocation2 + $0x18] sm:$0xff]
    %v66 = vld [vmem:[#allocation2 + $0x20] sm:$0xff]
    %v67 = vld [vmem:[#allocation2 + $0x28] sm:$0xff]
    %v68 = vld [vmem:[#allocation2 + $0x30] sm:$0xff]
    %v69 = vld [vmem:[#allocation2 + $0x38] sm:$0xff]
    %v70 = vld [vmem:[%s2] sm:$0x3]
    %v72 = vlaneseq
    %v73 = vshrl.u32 %v72, 7
    %v74 = vsub.s32 0, %v73
    %v75 = vrot.slane %v70, %v74
    %v76 = vlaneseq
    %v77 = vshrl.u32 %v76, 7
    %v78 = vsub.s32 1, %v77
    %v79 = vrot.slane %v70, %v78
    %vm82 = vcmask 261120
    %v84 = vsel %vm82, %v61, 0
    %86 = vmatprep.subr.mxu0 0.0
    %87 = vmatpush1.msra.mxu0 0.0
    %88 = vmatprep.subr.mxu0 0.0
    %89 = vmatpush1.msra.mxu0 0.0
    %90 = vmatprep.subr.mxu0 0.0
    %91 = vmatpush1.msra.mxu0 0.0
    %92 = vmatprep.subr.mxu0 0.0
    %93 = vmatpush1.msra.mxu0 0.0
    %94 = vmatprep.subr.mxu0 0.0
    %95 = vmatpush1.msra.mxu0 0.0
    %96 = vmatprep.subr.mxu0 0.0
    %97 = vmatpush1.msra.mxu0 0.0
    %98 = vmatprep.subr.mxu0 0.0
    %99 = vmatpush1.msra.mxu0 0.0
    %100 = vmatprep.subr.mxu0 0.0
    %101 = vmatpush1.msra.mxu0 0.0
    %102 = vmatprep.subr.mxu0 0.0
    %103 = vmatpush1.msra.mxu0 0.0
    %104 = vmatprep.subr.mxu0 0.0
    %105 = vmatpush1.msra.mxu0 0.0
    %106 = vmatprep.subr.mxu0 0.0
    %107 = vmatpush1.msra.mxu0 0.0
    %108 = vmatprep.subr.mxu0 0.0
    %109 = vmatpush1.msra.mxu0 0.0
    %110 = vmatprep.subr.mxu0 %v69
    %111 = vmatpush1.msra.mxu0 %v68
    %112 = vmatprep.subr.mxu0 %v67
    %113 = vmatpush1.msra.mxu0 %v66
    %114 = vmatprep.subr.mxu0 %v65
    %115 = vmatpush1.msra.mxu0 %v64
    %116 = vmatprep.subr.mxu0 %v63
    %117 = vmatpush1.msra.mxu0 %v62
    %118 = vmatprep.subr.mxu0 0.0
    %119 = vmatpush2.msra.mxu0 0.0
    %120 = vmatprep.subr.mxu0 0.0
    %121 = vmatpush2.msra.mxu0 0.0
    %122 = vmatprep.subr.mxu0 0.0
    %123 = vmatpush2.msra.mxu0 0.0
    %124 = vmatprep.subr.mxu0 0.0
    %125 = vmatpush2.msra.mxu0 0.0
    %126 = vmatprep.subr.mxu0 0.0
    %127 = vmatpush2.msra.mxu0 0.0
    %128 = vmatprep.subr.mxu0 0.0
    %129 = vmatpush2.msra.mxu0 0.0
    %130 = vmatprep.subr.mxu0 0.0
    %131 = vmatpush2.msra.mxu0 0.0
    %132 = vmatprep.subr.mxu0 0.0
    %133 = vmatpush2.msra.mxu0 0.0
    %134 = vmatprep.subr.mxu0 0.0
    %135 = vmatpush2.msra.mxu0 0.0
    %136 = vmatprep.subr.mxu0 0.0
    %137 = vmatpush2.msra.mxu0 0.0
    %138 = vmatprep.subr.mxu0 0.0
    %139 = vmatpush2.msra.mxu0 0.0
    %140 = vmatprep.subr.mxu0 0.0
    %141 = vmatpush2.msra.mxu0 0.0
    %142 = vmatprep.subr.mxu0 0.0
    %143 = vmatpush2.msra.mxu0 0.0
    %144 = vmatprep.subr.mxu0 0.0
    %145 = vmatpush2.msra.mxu0 0.0
    %146 = vmatprep.subr.mxu0 0.0
    %147 = vmatpush2.msra.mxu0 0.0
    %148 = vmatprep.subr.mxu0 0.0
    %149 = vmatpush2.msra.mxu0 0.0
    %150 = vmatprep.mubr.f32.mxu0 0.0
    %151 = vmatmul.mubr.f32.gmra.mxu0 %v84
    %v152 = vpop.f32.mrf.mxu0
    %v153 = vadd.f32 %v75, %v152
    %v154 = vpop.f32.mrf.mxu0
    %v155 = vadd.f32 %v79, %v154
    %156 = vdwg.mxu0
    %v157 = vmax.f32 %v153, 0.0
    %v158 = vmax.f32 %v155, 0.0
    %v159 = vld [vmem:[#allocation5] sm:$0xff]
    %v160 = vld [vmem:[#allocation5 + $0x8] sm:$0xff]
    %v161 = vld [vmem:[#allocation5 + $0x10] sm:$0xff]
    %v162 = vld [vmem:[#allocation5 + $0x18] sm:$0xff]
    %v163 = vld [vmem:[#allocation5 + $0x20] sm:$0xff]
    %v164 = vld [vmem:[#allocation5 + $0x28] sm:$0xff]
    %v165 = vld [vmem:[#allocation5 + $0x30] sm:$0xff]
    %v166 = vld [vmem:[#allocation5 + $0x38] sm:$0xff]
    %v167 = vld [vmem:[#allocation5 + $0x40] sm:$0xff]
    %v168 = vld [vmem:[#allocation5 + $0x48] sm:$0xff]
    %v169 = vld [vmem:[#allocation5 + $0x50] sm:$0xff]
    %v170 = vld [vmem:[#allocation5 + $0x58] sm:$0xff]
    %v171 = vld [vmem:[#allocation5 + $0x60] sm:$0xff]
    %v172 = vld [vmem:[#allocation5 + $0x68] sm:$0xff]
    %v173 = vld [vmem:[#allocation5 + $0x70] sm:$0xff]
    %v174 = vld [vmem:[#allocation5 + $0x78] sm:$0xff]
    %v175 = vld [vmem:[#allocation5 + $0x80] sm:$0xff]
    %v176 = vld [vmem:[#allocation5 + $0x88] sm:$0xff]
    %v177 = vld [vmem:[#allocation5 + $0x90] sm:$0xff]
    %v178 = vld [vmem:[#allocation5 + $0x98] sm:$0xff]
    %v179 = vld [vmem:[#allocation5 + $0xa0] sm:$0xff]
    %v180 = vld [vmem:[#allocation5 + $0xa8] sm:$0xff]
    %v181 = vld [vmem:[#allocation5 + $0xb0] sm:$0xff]
    %v182 = vld [vmem:[#allocation5 + $0xb8] sm:$0xff]
    %v183 = vld [vmem:[#allocation5 + $0xc0] sm:$0xff]
    %v184 = vld [vmem:[#allocation5 + $0xc8] sm:$0xff]
    %v185 = vld [vmem:[#allocation5 + $0xd0] sm:$0xff]
    %v186 = vld [vmem:[#allocation5 + $0xd8] sm:$0xff]
    %v187 = vld [vmem:[#allocation5 + $0xe0] sm:$0xff]
    %v188 = vld [vmem:[#allocation5 + $0xe8] sm:$0xff]
    %v189 = vld [vmem:[#allocation5 + $0xf0] sm:$0xff]
    %v190 = vld [vmem:[#allocation5 + $0xf8] sm:$0xff]
    %v191 = vld [vmem:[%s4] sm:$0x1]
    %v193 = vlaneseq
    %v194 = vshrl.u32 %v193, 7
    %v195 = vsub.s32 0, %v194
    %v196 = vrot.slane %v191, %v195
    %198 = vmatprep.subr.mxu0 0.0
    %199 = vmatpush1.msra.mxu0 %v174
    %200 = vmatprep.subr.mxu0 0.0
    %201 = vmatpush1.msra.mxu0 %v173
    %202 = vmatprep.subr.mxu0 0.0
    %203 = vmatpush1.msra.mxu0 %v172
    %204 = vmatprep.subr.mxu0 0.0
    %205 = vmatpush1.msra.mxu0 %v171
    %206 = vmatprep.subr.mxu0 0.0
    %207 = vmatpush1.msra.mxu0 %v170
    %208 = vmatprep.subr.mxu0 0.0
    %209 = vmatpush1.msra.mxu0 %v169
    %210 = vmatprep.subr.mxu0 0.0
    %211 = vmatpush1.msra.mxu0 %v168
    %212 = vmatprep.subr.mxu0 0.0
    %213 = vmatpush1.msra.mxu0 %v167
    %214 = vmatprep.subr.mxu0 0.0
    %215 = vmatpush1.msra.mxu0 %v166
    %216 = vmatprep.subr.mxu0 0.0
    %217 = vmatpush1.msra.mxu0 %v165
    %218 = vmatprep.subr.mxu0 0.0
    %219 = vmatpush1.msra.mxu0 %v164
    %220 = vmatprep.subr.mxu0 0.0
    %221 = vmatpush1.msra.mxu0 %v163
    %222 = vmatprep.subr.mxu0 0.0
    %223 = vmatpush1.msra.mxu0 %v162
    %224 = vmatprep.subr.mxu0 0.0
    %225 = vmatpush1.msra.mxu0 %v161
    %226 = vmatprep.subr.mxu0 0.0
    %227 = vmatpush1.msra.mxu0 %v160
    %228 = vmatprep.subr.mxu0 0.0
    %229 = vmatpush1.msra.mxu0 %v159
    %230 = vmatprep.subr.mxu0 0.0
    %231 = vmatpush2.msra.mxu0 %v190
    %232 = vmatprep.subr.mxu0 0.0
    %233 = vmatpush2.msra.mxu0 %v189
    %234 = vmatprep.subr.mxu0 0.0
    %235 = vmatpush2.msra.mxu0 %v188
    %236 = vmatprep.subr.mxu0 0.0
    %237 = vmatpush2.msra.mxu0 %v187
    %238 = vmatprep.subr.mxu0 0.0
    %239 = vmatpush2.msra.mxu0 %v186
    %240 = vmatprep.subr.mxu0 0.0
    %241 = vmatpush2.msra.mxu0 %v185
    %242 = vmatprep.subr.mxu0 0.0
    %243 = vmatpush2.msra.mxu0 %v184
    %244 = vmatprep.subr.mxu0 0.0
    %245 = vmatpush2.msra.mxu0 %v183
    %246 = vmatprep.subr.mxu0 0.0
    %247 = vmatpush2.msra.mxu0 %v182
    %248 = vmatprep.subr.mxu0 0.0
    %249 = vmatpush2.msra.mxu0 %v181
    %250 = vmatprep.subr.mxu0 0.0
    %251 = vmatpush2.msra.mxu0 %v180
    %252 = vmatprep.subr.mxu0 0.0
    %253 = vmatpush2.msra.mxu0 %v179
    %254 = vmatprep.subr.mxu0 0.0
    %255 = vmatpush2.msra.mxu0 %v178
    %256 = vmatprep.subr.mxu0 0.0
    %257 = vmatpush2.msra.mxu0 %v177
    %258 = vmatprep.subr.mxu0 0.0
    %259 = vmatpush2.msra.mxu0 %v176
    %260 = vmatprep.subr.mxu0 0.0
    %261 = vmatpush2.msra.mxu0 %v175
    %262 = vmatprep.mubr.f32.mxu0 %v158
    %263 = vmatmul.mubr.f32.gmra.mxu0 %v157
    %v264 = vpop.f32.mrf.mxu0
    %v265 = vadd.f32 %v196, %v264
    %v266 = vpop.f32.mrf.mxu0
    %267 = vdwg.mxu0
    %v268 = vmax.f32 %v265, 0.0
    %v269 = vld [vmem:[%s5] sm:$0xff]
    %v270 = vld [vmem:[%s5 + $0x8] sm:$0xff]
    %v271 = vld [vmem:[%s5 + $0x10] sm:$0xff]
    %v272 = vld [vmem:[%s5 + $0x18] sm:$0xff]
    %v273 = vld [vmem:[%s5 + $0x20] sm:$0xff]
    %v274 = vld [vmem:[%s5 + $0x28] sm:$0xff]
    %v275 = vld [vmem:[%s5 + $0x30] sm:$0xff]
    %v276 = vld [vmem:[%s5 + $0x38] sm:$0xff]
    %v277 = vld [vmem:[%s5 + $0x40] sm:$0xff]
    %v278 = vld [vmem:[%s5 + $0x48] sm:$0xff]
    %v279 = vld [vmem:[%s5 + $0x50] sm:$0xff]
    %v280 = vld [vmem:[%s5 + $0x58] sm:$0xff]
    %v281 = vld [vmem:[%s5 + $0x60] sm:$0xff]
    %v282 = vld [vmem:[%s5 + $0x68] sm:$0xff]
    %v283 = vld [vmem:[%s5 + $0x70] sm:$0xff]
    %v284 = vld [vmem:[%s5 + $0x78] sm:$0xff]
    %v285 = vld [vmem:[%s6] sm:$0x1]
    %v287 = vlaneseq
    %v288 = vshrl.u32 %v287, 7
    %v289 = vsub.s32 0, %v288
    %v290 = vrot.slane %v285, %v289
    %292 = vmatprep.subr.mxu0 0.0
    %293 = vmatpush1.msra.mxu0 %v284
    %294 = vmatprep.subr.mxu0 0.0
    %295 = vmatpush1.msra.mxu0 %v283
    %296 = vmatprep.subr.mxu0 0.0
    %297 = vmatpush1.msra.mxu0 %v282
    %298 = vmatprep.subr.mxu0 0.0
    %299 = vmatpush1.msra.mxu0 %v281
    %300 = vmatprep.subr.mxu0 0.0
    %301 = vmatpush1.msra.mxu0 %v280
    %302 = vmatprep.subr.mxu0 0.0
    %303 = vmatpush1.msra.mxu0 %v279
    %304 = vmatprep.subr.mxu0 0.0
    %305 = vmatpush1.msra.mxu0 %v278
    %306 = vmatprep.subr.mxu0 0.0
    %307 = vmatpush1.msra.mxu0 %v277
    %308 = vmatprep.subr.mxu0 0.0
    %309 = vmatpush1.msra.mxu0 %v276
    %310 = vmatprep.subr.mxu0 0.0
    %311 = vmatpush1.msra.mxu0 %v275
    %312 = vmatprep.subr.mxu0 0.0
    %313 = vmatpush1.msra.mxu0 %v274
    %314 = vmatprep.subr.mxu0 0.0
    %315 = vmatpush1.msra.mxu0 %v273
    %316 = vmatprep.subr.mxu0 0.0
    %317 = vmatpush1.msra.mxu0 %v272
    %318 = vmatprep.subr.mxu0 0.0
    %319 = vmatpush1.msra.mxu0 %v271
    %320 = vmatprep.subr.mxu0 0.0
    %321 = vmatpush1.msra.mxu0 %v270
    %322 = vmatprep.subr.mxu0 0.0
    %323 = vmatpush1.msra.mxu0 %v269
    %324 = vmatprep.subr.mxu0 0.0
    %325 = vmatpush2.msra.mxu0 0.0
    %326 = vmatprep.subr.mxu0 0.0
    %327 = vmatpush2.msra.mxu0 0.0
    %328 = vmatprep.subr.mxu0 0.0
    %329 = vmatpush2.msra.mxu0 0.0
    %330 = vmatprep.subr.mxu0 0.0
    %331 = vmatpush2.msra.mxu0 0.0
    %332 = vmatprep.subr.mxu0 0.0
    %333 = vmatpush2.msra.mxu0 0.0
    %334 = vmatprep.subr.mxu0 0.0
    %335 = vmatpush2.msra.mxu0 0.0
    %336 = vmatprep.subr.mxu0 0.0
    %337 = vmatpush2.msra.mxu0 0.0
    %338 = vmatprep.subr.mxu0 0.0
    %339 = vmatpush2.msra.mxu0 0.0
    %340 = vmatprep.subr.mxu0 0.0
    %341 = vmatpush2.msra.mxu0 0.0
    %342 = vmatprep.subr.mxu0 0.0
    %343 = vmatpush2.msra.mxu0 0.0
    %344 = vmatprep.subr.mxu0 0.0
    %345 = vmatpush2.msra.mxu0 0.0
    %346 = vmatprep.subr.mxu0 0.0
    %347 = vmatpush2.msra.mxu0 0.0
    %348 = vmatprep.subr.mxu0 0.0
    %349 = vmatpush2.msra.mxu0 0.0
    %350 = vmatprep.subr.mxu0 0.0
    %351 = vmatpush2.msra.mxu0 0.0
    %352 = vmatprep.subr.mxu0 0.0
    %353 = vmatpush2.msra.mxu0 0.0
    %354 = vmatprep.subr.mxu0 0.0
    %355 = vmatpush2.msra.mxu0 0.0
    %356 = vmatprep.mubr.f32.mxu0 0.0
    %357 = vmatmul.mubr.f32.gmra.mxu0 %v268
    %v358 = vpop.f32.mrf.mxu0
    %v359 = vadd.f32 %v290, %v358
    %v360 = vpop.f32.mrf.mxu0
    %361 = vdwg.mxu0
    %v362 = vmax.f32 %v359, 0.0
    %v363 = vld [vmem:[%s7] sm:$0xff]
    %v364 = vld [vmem:[%s7 + $0x8] sm:$0xff]
    %v365 = vld [vmem:[%s7 + $0x10] sm:$0xff]
    %v366 = vld [vmem:[%s7 + $0x18] sm:$0xff]
    %v367 = vld [vmem:[%s7 + $0x20] sm:$0xff]
    %v368 = vld [vmem:[%s7 + $0x28] sm:$0xff]
    %v369 = vld [vmem:[%s7 + $0x30] sm:$0xff]
    %v370 = vld [vmem:[%s7 + $0x38] sm:$0xff]
    %v371 = vld [vmem:[%s7 + $0x40] sm:$0xff]
    %v372 = vld [vmem:[%s7 + $0x48] sm:$0xff]
    %v373 = vld [vmem:[%s7 + $0x50] sm:$0xff]
    %v374 = vld [vmem:[%s7 + $0x58] sm:$0xff]
    %v375 = vld [vmem:[%s7 + $0x60] sm:$0xff]
    %v376 = vld [vmem:[%s7 + $0x68] sm:$0xff]
    %v377 = vld [vmem:[%s7 + $0x70] sm:$0xff]
    %v378 = vld [vmem:[%s7 + $0x78] sm:$0xff]
    %v379 = vld [vmem:[%s8] sm:$0x1]
    %v381 = vlaneseq
    %v382 = vshrl.u32 %v381, 7
    %v383 = vsub.s32 0, %v382
    %v384 = vrot.slane %v379, %v383
    %386 = vmatprep.subr.mxu0 0.0
    %387 = vmatpush1.msra.mxu0 %v378
    %388 = vmatprep.subr.mxu0 0.0
    %389 = vmatpush1.msra.mxu0 %v377
    %390 = vmatprep.subr.mxu0 0.0
    %391 = vmatpush1.msra.mxu0 %v376
    %392 = vmatprep.subr.mxu0 0.0
    %393 = vmatpush1.msra.mxu0 %v375
    %394 = vmatprep.subr.mxu0 0.0
    %395 = vmatpush1.msra.mxu0 %v374
    %396 = vmatprep.subr.mxu0 0.0
    %397 = vmatpush1.msra.mxu0 %v373
    %398 = vmatprep.subr.mxu0 0.0
    %399 = vmatpush1.msra.mxu0 %v372
    %400 = vmatprep.subr.mxu0 0.0
    %401 = vmatpush1.msra.mxu0 %v371
    %402 = vmatprep.subr.mxu0 0.0
    %403 = vmatpush1.msra.mxu0 %v370
    %404 = vmatprep.subr.mxu0 0.0
    %405 = vmatpush1.msra.mxu0 %v369
    %406 = vmatprep.subr.mxu0 0.0
    %407 = vmatpush1.msra.mxu0 %v368
    %408 = vmatprep.subr.mxu0 0.0
    %409 = vmatpush1.msra.mxu0 %v367
    %410 = vmatprep.subr.mxu0 0.0
    %411 = vmatpush1.msra.mxu0 %v366
    %412 = vmatprep.subr.mxu0 0.0
    %413 = vmatpush1.msra.mxu0 %v365
    %414 = vmatprep.subr.mxu0 0.0
    %415 = vmatpush1.msra.mxu0 %v364
    %416 = vmatprep.subr.mxu0 0.0
    %417 = vmatpush1.msra.mxu0 %v363
    %418 = vmatprep.subr.mxu0 0.0
    %419 = vmatpush2.msra.mxu0 0.0
    %420 = vmatprep.subr.mxu0 0.0
    %421 = vmatpush2.msra.mxu0 0.0
    %422 = vmatprep.subr.mxu0 0.0
    %423 = vmatpush2.msra.mxu0 0.0
    %424 = vmatprep.subr.mxu0 0.0
    %425 = vmatpush2.msra.mxu0 0.0
    %426 = vmatprep.subr.mxu0 0.0
    %427 = vmatpush2.msra.mxu0 0.0
    %428 = vmatprep.subr.mxu0 0.0
    %429 = vmatpush2.msra.mxu0 0.0
    %430 = vmatprep.subr.mxu0 0.0
    %431 = vmatpush2.msra.mxu0 0.0
    %432 = vmatprep.subr.mxu0 0.0
    %433 = vmatpush2.msra.mxu0 0.0
    %434 = vmatprep.subr.mxu0 0.0
    %435 = vmatpush2.msra.mxu0 0.0
    %436 = vmatprep.subr.mxu0 0.0
    %437 = vmatpush2.msra.mxu0 0.0
    %438 = vmatprep.subr.mxu0 0.0
    %439 = vmatpush2.msra.mxu0 0.0
    %440 = vmatprep.subr.mxu0 0.0
    %441 = vmatpush2.msra.mxu0 0.0
    %442 = vmatprep.subr.mxu0 0.0
    %443 = vmatpush2.msra.mxu0 0.0
    %444 = vmatprep.subr.mxu0 0.0
    %445 = vmatpush2.msra.mxu0 0.0
    %446 = vmatprep.subr.mxu0 0.0
    %447 = vmatpush2.msra.mxu0 0.0
    %448 = vmatprep.subr.mxu0 0.0
    %449 = vmatpush2.msra.mxu0 0.0
    %450 = vmatprep.mubr.f32.mxu0 0.0
    %451 = vmatmul.mubr.f32.gmra.mxu0 %v362
    %v452 = vpop.f32.mrf.mxu0
    %v453 = vadd.f32 %v384, %v452
    %v454 = vpop.f32.mrf.mxu0
    %455 = vdwg.mxu0
    %vm456 = vcmask 80896
    %457 = vst.msk [vmem:[#allocation7] sm:$0xff] %vm456, %v453
    // Predicated region
    $region46: #{tpu_custom_call.1} parent=1 // pred_check
      _
    $region47: #{tpu_custom_call.1} parent=1 // pred_check_branch
      %459 = sbr.rel (0) target = $region49
    $region48: #{tpu_custom_call.1} parent=1 // pred_region
      %s461 = ssub.s32 128, 128
      %462 = vsyncadd [#allocation4], %s461
      %s464 = sshll.u32 [#allocation7], 4
      %s465 = int_to_ptr.vmem [resolvable:$true] %s464
      %467 = dma.vmem_to_hbm [thread:$0]  %s465, 128, %s9, [#allocation4]
    $region49: #{tpu_custom_call.1} parent=1 // pred_fallthru
      _
    // Predicated region
    $region50: #{tpu_custom_call.1} parent=1 // pred_check
      _
    $region51: #{tpu_custom_call.1} parent=1 // pred_check_branch
      %469 = sbr.rel (0) target = $region53
    $region52: #{tpu_custom_call.1} parent=1 // pred_region
      %470 = dma.done [#allocation4], 128
    $region53: #{tpu_custom_call.1} parent=1 // pred_fallthru
      _
    %471 = vsyncpa [#allocation3], 1
    %472 = vsyncpa [#allocation6], 1
    %473 = vsyncpa [#allocation4], 1

</llo_original>
